<compile_context>
chip_gen: v7x
topology: tpu7x:2x2x1
jax: 0.10.0
libtpu: 0.0.40
codegen_flags: <defaults>
</compile_context>

<pallas_src>
import jax
import jax.numpy as jnp
from jax.experimental import pallas as pl
from jax.experimental.pallas import tpu as pltpu

_LANE = 128
_MAX_LANES = 2048            # max lane width of a block (multiple of 128)
_MAX_BLOCK_BYTES = 4 << 20   # ~4 MiB per block
_MIN_STEP_BYTES = 256 << 10  # don't split work below ~256 KiB per grid step
_VMEM_LIMIT_BYTES = 32 << 20


def _round_up(a, b):
    return -(-a // b) * b


def _pick_lanes(total, max_lanes):
    """Pick the lane width of the flattened (rows, lanes) slab.

    Prefer the largest multiple of 128 (<= max_lanes) that divides `total`
    exactly (no pad, no tail slice).  Among exact divisors prefer one that
    leaves >= 8 rows so the vreg sublane axis is filled.  Fall back to
    minimal zero-padding only when no 128-multiple divisor exists.
    Returns (lanes, needs_pad).
    """
    fallback = 0
    for lanes in range(max_lanes, 0, -_LANE):
        if total % lanes == 0:
            if total // lanes >= 8:
                return lanes, False
            if fallback == 0:
                fallback = lanes
    if fallback:
        return fallback, False
    lanes = max(_LANE, min(max_lanes, (total // (8 * _LANE)) * _LANE))
    return lanes, True


def _pick_row_tile(rows, lanes, itemsize):
    """Sublane (row) tile: dtype-aware packing, <= ~4 MiB blocks, and an even
    (>= 4 when work allows) grid so v7x's 2 TensorCores split evenly."""
    sublane = max(8, 32 // itemsize)     # 8 rows f32, 16 bf16, 32 int8/fp8
    if rows <= sublane:
        return rows                      # full-extent block (tiny input)
    max_rt = max(sublane,
                 (_MAX_BLOCK_BYTES // (lanes * itemsize)) // sublane * sublane)
    rows_r = _round_up(rows, sublane)
    min_step_rows = max(
        sublane,
        _round_up(max(1, _MIN_STEP_BYTES // (lanes * itemsize)), sublane))

    steps = pl.cdiv(rows_r, max_rt)
    if rows_r >= 4 * min_step_rows:      # >= 2 pipelined steps per core
        steps = max(steps, 4)
    elif rows_r >= 2 * min_step_rows:    # >= 1 step per core
        steps = max(steps, 2)
    if steps > 1 and steps % 2:          # even split across 2 TCs
        steps += 1
    return min(max_rt, _round_up(pl.cdiv(rows_r, steps), sublane))


def _scale_shift_kernel(add_ref, scale_ref, x_ref, o_ref):
    # add_ref / scale_ref: (1,) f32 scalars in SMEM (scale = exp(log_factor),
    # already hoisted to the wrapper).  x_ref / o_ref: (row_tile, lanes) VMEM.
    shift = add_ref[0]
    scale = scale_ref[0]
    xf = x_ref[...].astype(jnp.float32)
    o_ref[...] = ((xf + shift) * scale).astype(o_ref.dtype)


def scale_and_shift_forward(x, add, log_factor):
    """y = (x + add) * exp(log_factor); add/log_factor are (1,) params."""
    orig_shape = x.shape
    dtype = x.dtype
    itemsize = jnp.dtype(dtype).itemsize
    total = x.size

    lanes, needs_pad = _pick_lanes(total, _MAX_LANES)
    rows = pl.cdiv(total, lanes)
    row_tile = _pick_row_tile(rows, lanes, itemsize)
    grid = (pl.cdiv(rows, row_tile),)

    x_flat = x.reshape(-1)
    if needs_pad:
        # Fallback only: no 128-multiple divisor of total exists.
        x_flat = jnp.pad(x_flat, (0, rows * lanes - total))
    x2 = x_flat.reshape(rows, lanes)

    add_s = jnp.asarray(add, dtype=jnp.float32).reshape(1)
    # Hoist exp(log_factor): one scalar exp here instead of a lanes-wide
    # broadcast + EUP exp re-executed on every (sequential) grid step.
    scale_s = jnp.exp(jnp.asarray(log_factor, dtype=jnp.float32)).reshape(1)

    out = pl.pallas_call(
        _scale_shift_kernel,
        out_shape=jax.ShapeDtypeStruct((rows, lanes), dtype),
        grid_spec=pltpu.PrefetchScalarGridSpec(
            num_scalar_prefetch=0,
            grid=grid,
            in_specs=[
                pl.BlockSpec(memory_space=pltpu.MemorySpace.SMEM),
                pl.BlockSpec(memory_space=pltpu.MemorySpace.SMEM),
                pl.BlockSpec((row_tile, lanes), lambda i: (i, 0)),
            ],
            out_specs=pl.BlockSpec((row_tile, lanes), lambda i: (i, 0)),
        ),
        compiler_params=pltpu.CompilerParams(
            dimension_semantics=("parallel",),
            vmem_limit_bytes=_VMEM_LIMIT_BYTES,
        ),
        cost_estimate=pl.CostEstimate(
            flops=2 * rows * lanes,
            transcendentals=0,
            bytes_accessed=2 * rows * lanes * itemsize + 8,
        ),
    )(add_s, scale_s, x2)

    if needs_pad:
        out = out.reshape(-1)[:total]
    return out.reshape(orig_shape)


# TODO(synk): ScaleAndShift.invert (y / exp(log_factor) - add) is not needed
# for the forward pass and is not implemented here.


if __name__ == "__main__":
    key = jax.random.PRNGKey(0)
    kx, ka, kf = jax.random.split(key, 3)

    N, C, H, W = 2, 4, 16, 16
    x = jax.random.normal(kx, (N, C, H, W), dtype=jnp.float32)

    # nn.Parameter(th.zeros(1)) would make the op the identity; use small
    # deterministic non-zero values so the kernel is actually exercised.
    add = 0.3 * jax.random.normal(ka, (1,), dtype=jnp.float32)
    log_factor = 0.2 * jax.random.normal(kf, (1,), dtype=jnp.float32)

    y = scale_and_shift_forward(x, add, log_factor)
    y = jax.block_until_ready(y)

    # Reference check against plain JAX.
    y_ref = (x + add[0]) * jnp.exp(log_factor[0])
    assert y.shape == x.shape and y.dtype == x.dtype
    assert jnp.allclose(y, y_ref, rtol=1e-5, atol=1e-5)

    print("KERNEL_OK")
</pallas_src>

<mosaic_0001>
module attributes {stable_mosaic.version = 11 : i64} {
  func.func @_scale_shift_kernel(%arg0: i32, %arg1: memref<1xf32, #tpu.memory_space<smem>>, %arg2: memref<1xf32, #tpu.memory_space<smem>>, %arg3: memref<8x256xf32, #tpu.memory_space<vmem>>, %arg4: memref<8x256xf32, #tpu.memory_space<vmem>>) attributes {dimension_semantics = [#tpu.dimension_semantics<parallel>], iteration_bounds = array<i64: 1>, scalar_prefetch = 0 : i64, scratch_operands = 0 : i64, tpu.core_type = #tpu.core_type<tc>, window_params = [{transform_indices = @transform_0, window_bounds = array<i64: 1>}, {transform_indices = @transform_1, window_bounds = array<i64: 1>}, {transform_indices = @transform_2, window_bounds = array<i64: 8, 256>}, {transform_indices = @transform_3, window_bounds = array<i64: 8, 256>}]} {
    %c0 = arith.constant 0 : index
    %0 = memref.load %arg1[%c0] : memref<1xf32, #tpu.memory_space<smem>>
    %c0_0 = arith.constant 0 : index
    %1 = memref.load %arg2[%c0_0] : memref<1xf32, #tpu.memory_space<smem>>
    %c0_1 = arith.constant 0 : index
    %c0_2 = arith.constant 0 : index
    %2 = vector.load %arg3[%c0_1, %c0_2] : memref<8x256xf32, #tpu.memory_space<vmem>>, vector<8x256xf32>
    %3 = vector.broadcast %0 : f32 to vector<8x256xf32>
    %4 = arith.addf %2, %3 : vector<8x256xf32>
    %5 = vector.broadcast %1 : f32 to vector<8x256xf32>
    %6 = arith.mulf %4, %5 : vector<8x256xf32>
    %c0_3 = arith.constant 0 : index
    %c0_4 = arith.constant 0 : index
    %7 = vector.load %arg4[%c0_3, %c0_4] : memref<8x256xf32, #tpu.memory_space<vmem>>, vector<8x256xf32>
    tpu.vector_store %arg4[%c0_3, %c0_4], %6 {strides = array<i32>} : memref<8x256xf32, #tpu.memory_space<vmem>>, vector<8x256xf32>,
    return
  }
  func.func @transform_0(%arg0: i32) -> i32 {
    %c0_i32 = arith.constant 0 : i32
    %c0_i32_0 = arith.constant 0 : i32
    return %c0_i32 : i32
  }
  func.func @transform_1(%arg0: i32) -> i32 {
    %c0_i32 = arith.constant 0 : i32
    %c0_i32_0 = arith.constant 0 : i32
    return %c0_i32 : i32
  }
  func.func @transform_2(%arg0: i32) -> (i32, i32) {
    %c0_i32 = arith.constant 0 : i32
    %c0_i32_0 = arith.constant 0 : i32
    return %arg0, %c0_i32 : i32, i32
  }
  func.func @transform_3(%arg0: i32) -> (i32, i32) {
    %c0_i32 = arith.constant 0 : i32
    %c0_i32_0 = arith.constant 0 : i32
    return %arg0, %c0_i32 : i32, i32
  }
}

</mosaic_0001>

<llo_original>
// kernel: tpu_custom_call.1
$region0: #{tpu_custom_call.1}
  #allocation0 [shape = 'u32[]', space=smem, size = 0x4, offset = 0x4, fixed_abs, tag = 'smem constant byte address 0x4 - core index']
  #allocation1 [shape = 'u32[144,128]{1,0:T(1,128)}', space=vmem, size = 0x12000, scoped, tag = 'internal scratch']
  #allocation2 [shape = 'f32[1]{0:T(128)S(6)}', space=smem, size = 0x200, scoped, tag = 'scoped memory for tpu_custom_call.1']
  #allocation3 [shape = 'f32[1]{0:T(128)S(6)}', space=smem, size = 0x200, scoped, tag = 'scoped memory for tpu_custom_call.1']
  %s0 = inlined_call_operand.<no memory space> [shape: f32[1], index: 0, kind: input, shape index: {}]
  %s1 = inlined_call_operand.<no memory space> [shape: f32[1], index: 1, kind: input, shape index: {}]
  %s2 = inlined_call_operand.hbm [shape: f32[8,256], index: 2, kind: input, shape index: {}]
  %s3 = inlined_call_operand.hbm [shape: f32[8,256], index: 3, kind: output, shape index: {}]
  %s4 = sld [smem:[#allocation0]]
  $region26: #{tpu_custom_call.1} parent=0
    _
  %s6 = ssub.s32 1, %s4
  %s7 = scalar_select 0, %s6, %s4
  %8 = sst [smem:[#allocation2]] %s0
  %9 = sst [smem:[#allocation3]] %s1
  $region1: #{tpu_custom_call.1} parent=0
    #allocation4 [shape = 'u8[8192]{0}', space=vmem, size = 0x2000, scoped, tag = 'input window, operand 2, single buffered']
    #allocation5 [shape = 's32[1]{0}', space=sflag, size = 0x4, scoped, tag = 'scoped memory for tpu_custom_call.1']
    #allocation6 [shape = 's32[1]{0}', space=sflag, size = 0x4, scoped, tag = 'scoped memory for tpu_custom_call.1']
    #allocation7 [shape = 'u8[8192]{0}', space=vmem, size = 0x2000, scoped, tag = 'output window, operand 0, single buffered']
    %10 = vsyncpa [#allocation5], 0
    %11 = vsyncpa [#allocation6], 0
    // Predicated region
    $region2: #{tpu_custom_call.1} parent=1 // pred_check
      _
    $region3: #{tpu_custom_call.1} parent=1 // pred_check_branch
      %13 = sbr.rel (0) target = $region5
    $region4: #{tpu_custom_call.1} parent=1 // pred_region
      _
    $region5: #{tpu_custom_call.1} parent=1 // pred_fallthru
      _
    // Predicated region
    $region6: #{tpu_custom_call.1} parent=1 // pred_check
      _
    $region7: #{tpu_custom_call.1} parent=1 // pred_check_branch
      %15 = sbr.rel (0) target = $region9
    $region8: #{tpu_custom_call.1} parent=1 // pred_region
      _
    $region9: #{tpu_custom_call.1} parent=1 // pred_fallthru
      _
    // Predicated region
    $region10: #{tpu_custom_call.1} parent=1 // pred_check
      _
    $region11: #{tpu_custom_call.1} parent=1 // pred_check_branch
      %17 = sbr.rel (0) target = $region13
    $region12: #{tpu_custom_call.1} parent=1 // pred_region
      %s19 = ssub.s32 256, 256
      %20 = vsyncadd [#allocation5], %s19
      %s22 = sshll.u32 [#allocation4], 4
      %s23 = int_to_ptr.vmem [resolvable:$true] %s22
      %25 = dma.hbm_to_vmem [thread:$0]  %s2, 256, %s23, [#allocation5]
    $region13: #{tpu_custom_call.1} parent=1 // pred_fallthru
      _
    // Predicated region
    $region14: #{tpu_custom_call.1} parent=1 // pred_check
      _
    $region15: #{tpu_custom_call.1} parent=1 // pred_check_branch
      %27 = sbr.rel (0) target = $region17
    $region16: #{tpu_custom_call.1} parent=1 // pred_region
      %28 = dma.done [#allocation5], 256
    $region17: #{tpu_custom_call.1} parent=1 // pred_fallthru
      _
    %s29 = sld [smem:[#allocation2]]
    %s30 = sld [smem:[#allocation3]]
    %v31 = vld [vmem:[#allocation4] sm:$0xff]
    %v32 = vld [vmem:[#allocation4 + $0x8] sm:$0xff]
    %v33 = vstv %s29
    %v34 = vadd.f32 %v31, %v33
    %v35 = vadd.f32 %v32, %v33
    %v36 = vstv %s30
    %v37 = vmul.f32 %v34, %v36
    %v38 = vmul.f32 %v35, %v36
    %39 = vst [vmem:[#allocation7] sm:$0xff] %v37
    %40 = vst [vmem:[#allocation7 + $0x8] sm:$0xff] %v38
    // Predicated region
    $region18: #{tpu_custom_call.1} parent=1 // pred_check
      _
    $region19: #{tpu_custom_call.1} parent=1 // pred_check_branch
      %42 = sbr.rel (0) target = $region21
    $region20: #{tpu_custom_call.1} parent=1 // pred_region
      %s44 = ssub.s32 256, 256
      %45 = vsyncadd [#allocation6], %s44
      %s47 = sshll.u32 [#allocation7], 4
      %s48 = int_to_ptr.vmem [resolvable:$true] %s47
      %50 = dma.vmem_to_hbm [thread:$0]  %s48, 256, %s3, [#allocation6]
    $region21: #{tpu_custom_call.1} parent=1 // pred_fallthru
      _
    // Predicated region
    $region22: #{tpu_custom_call.1} parent=1 // pred_check
      _
    $region23: #{tpu_custom_call.1} parent=1 // pred_check_branch
      %52 = sbr.rel (0) target = $region25
    $region24: #{tpu_custom_call.1} parent=1 // pred_region
      %53 = dma.done [#allocation6], 256
    $region25: #{tpu_custom_call.1} parent=1 // pred_fallthru
      _
    %54 = vsyncpa [#allocation5], 1
    %55 = vsyncpa [#allocation6], 1

</llo_original>
